<compile_context>
chip_gen: v5e
topology: v5e:2x2
jax: 0.10.0
libtpu: 0.0.40
codegen_flags: <defaults>
</compile_context>

<pallas_src>
import jax
import jax.numpy as jnp
from jax.experimental import pallas as pl
from jax.experimental.pallas import tpu as pltpu


def _round_up(x, m):
    return ((x + m - 1) // m) * m


def _make_matmul_kernel(mxu_dtype):
    def matmul_kernel(a_ref, b_ref, o_ref, acc_ref):
        # f32 scratch accumulator, resident across the k (reduction) axis.
        @pl.when(pl.program_id(2) == 0)
        def _():
            acc_ref[...] = jnp.zeros_like(acc_ref)

        a = a_ref[...]
        b = b_ref[...]
        if mxu_dtype is not None:  # optional bf16 MXU inputs, f32 accumulate
            a = a.astype(mxu_dtype)
            b = b.astype(mxu_dtype)
        acc_ref[...] += jnp.dot(a, b, preferred_element_type=jnp.float32)

        # Single epilogue cast/store per (i, j) output tile.
        @pl.when(pl.program_id(2) == pl.num_programs(2) - 1)
        def _():
            o_ref[...] = acc_ref[...].astype(o_ref.dtype)

    return matmul_kernel


def pallas_matmul(x1, x2, *, tm=512, tn=1024, tk=512, use_bf16_mxu=False):
    """2-D matmul x1 @ x2 via Pallas (handles ragged shapes without full padding)."""
    M, K = x1.shape
    K2, N = x2.shape
    assert K == K2, "inner dimensions must match"

    out_dtype = jnp.result_type(x1.dtype, x2.dtype)
    if not jnp.issubdtype(out_dtype, jnp.floating):
        # TODO(synk): exact integer matmul (int32 accumulation) not implemented;
        # promote to float32 instead.
        out_dtype = jnp.float32
    a = x1.astype(out_dtype)
    b = x2.astype(out_dtype)

    # Clamp tile sizes to the problem while keeping TPU (8, 128) layout:
    # tm multiple of 8, tk/tn multiples of 128.
    tm = min(tm, _round_up(M, 8))
    tk = min(tk, _round_up(K, 128))
    tn = min(tn, _round_up(N, 128))

    # v7x megacore: make sure the parallel (i, j) grid has >= 2 blocks when N
    # allows it, preferring to split N (more j blocks) over shrinking tm.
    if pl.cdiv(M, tm) * pl.cdiv(N, tn) < 2 and N > 128:
        tn = _round_up(pl.cdiv(N, 2), 128)

    # Only the K overhang needs real zeros (garbage there would corrupt valid
    # outputs). Ragged M/N rely on pl.cdiv grids: out-of-bounds reads only
    # affect output rows/cols that are never written (partial-block stores are
    # masked), so no HBM-materialized padding copies are needed.
    Kp = _round_up(K, tk)
    if Kp != K:
        a = jnp.pad(a, ((0, 0), (0, Kp - K)))
        b = jnp.pad(b, ((0, Kp - K), (0, 0)))

    grid = (pl.cdiv(M, tm), pl.cdiv(N, tn), Kp // tk)

    in_itemsize = jnp.dtype(out_dtype).itemsize
    out_itemsize = in_itemsize
    # Real HBM traffic: A is re-read once per j block, B once per i block.
    cost = pl.CostEstimate(
        flops=2 * M * N * Kp,
        bytes_accessed=(
            in_itemsize * (M * Kp * grid[1] + Kp * N * grid[0])
            + out_itemsize * M * N
        ),
        transcendentals=0,
    )

    # VMEM budget: double-buffered A/B inputs + pipelined output + f32 scratch
    # accumulator, plus headroom for Mosaic internal scratch. ~12 MiB at the
    # default tiles -> comfortably under v7x's 64 MiB; v5e/v6e (128 MiB) have
    # room to spare if callers request larger tiles.
    vmem_need = (
        2 * (tm * tk + tk * tn) * in_itemsize
        + 2 * tm * tn * out_itemsize
        + tm * tn * 4
    )
    vmem_limit = int(min(max(vmem_need + (8 << 20), 32 << 20), 96 << 20))

    kernel = _make_matmul_kernel(jnp.bfloat16 if use_bf16_mxu else None)

    return pl.pallas_call(
        kernel,
        out_shape=jax.ShapeDtypeStruct((M, N), out_dtype),
        grid_spec=pltpu.PrefetchScalarGridSpec(
            num_scalar_prefetch=0,
            grid=grid,
            in_specs=[
                pl.BlockSpec((tm, tk), lambda i, j, k: (i, k)),
                pl.BlockSpec((tk, tn), lambda i, j, k: (k, j)),
            ],
            out_specs=pl.BlockSpec((tm, tn), lambda i, j, k: (i, j)),
            scratch_shapes=[pltpu.VMEM((tm, tn), jnp.float32)],
        ),
        compiler_params=pltpu.CompilerParams(
            dimension_semantics=("parallel", "parallel", "arbitrary"),
            vmem_limit_bytes=vmem_limit,
        ),
        cost_estimate=cost,
    )(a, b)


if __name__ == "__main__":
    key = jax.random.PRNGKey(0)
    k1, k2, k3, k4, k5, k6 = jax.random.split(key, 6)

    # Case 1: tile-aligned small matmul.
    M, K, N = 128, 256, 128
    x1 = jax.random.normal(k1, (M, K), dtype=jnp.float32)
    x2 = jax.random.normal(k2, (K, N), dtype=jnp.float32)
    out = jax.block_until_ready(pallas_matmul(x1, x2))
    ref = x1 @ x2
    assert out.shape == (M, N)
    assert jnp.allclose(out, ref, atol=1e-4, rtol=1e-4)

    # Case 2: ragged shapes (K padding + partial M/N boundary blocks).
    M2, K2_, N2 = 96, 200, 136
    y1 = jax.random.normal(k3, (M2, K2_), dtype=jnp.float32)
    y2 = jax.random.normal(k4, (K2_, N2), dtype=jnp.float32)
    out2 = jax.block_until_ready(pallas_matmul(y1, y2))
    ref2 = y1 @ y2
    assert out2.shape == (M2, N2)
    assert jnp.allclose(out2, ref2, atol=1e-4, rtol=1e-4)

    # Case 3: multi-step K reduction (exercises the scratch accumulator and
    # the >=2-parallel-tile split) with a small explicit tk.
    M3, K3, N3 = 128, 384, 256
    z1 = jax.random.normal(k5, (M3, K3), dtype=jnp.float32)
    z2 = jax.random.normal(k6, (K3, N3), dtype=jnp.float32)
    out3 = jax.block_until_ready(pallas_matmul(z1, z2, tk=128))
    ref3 = z1 @ z2
    assert out3.shape == (M3, N3)
    assert jnp.allclose(out3, ref3, atol=1e-3, rtol=1e-3)

    print("KERNEL_OK")
</pallas_src>

<mosaic_0001>
module attributes {stable_mosaic.version = 11 : i64} {
  func.func @matmul_kernel(%arg0: i32, %arg1: i32, %arg2: i32, %arg3: memref<128x256xf32, #tpu.memory_space<vmem>>, %arg4: memref<256x128xf32, #tpu.memory_space<vmem>>, %arg5: memref<128x128xf32, #tpu.memory_space<vmem>>, %arg6: memref<128x128xf32, #tpu.memory_space<vmem>>) attributes {dimension_semantics = [#tpu.dimension_semantics<parallel>, #tpu.dimension_semantics<parallel>, #tpu.dimension_semantics<arbitrary>], iteration_bounds = array<i64: 1, 1, 1>, scalar_prefetch = 0 : i64, scratch_operands = 1 : i64, tpu.core_type = #tpu.core_type<tc>, window_params = [{transform_indices = @transform_0, window_bounds = array<i64: 128, 256>}, {transform_indices = @transform_1, window_bounds = array<i64: 256, 128>}, {transform_indices = @transform_2, window_bounds = array<i64: 128, 128>}]} {
    %c0_i32 = arith.constant 0 : i32
    %0 = arith.cmpi eq, %arg2, %c0_i32 : i32
    %1 = arith.extui %0 : i1 to i32
    %c0_i32_0 = arith.constant 0 : i32
    %2 = arith.cmpi ne, %1, %c0_i32_0 : i32
    scf.if %2 {
      %cst_10 = arith.constant 0.000000e+00 : f32
      %12 = vector.broadcast %cst_10 : f32 to vector<128x128xf32>
      %c0_11 = arith.constant 0 : index
      %c0_12 = arith.constant 0 : index
      %13 = vector.load %arg6[%c0_11, %c0_12] : memref<128x128xf32, #tpu.memory_space<vmem>>, vector<128x128xf32>
      tpu.vector_store %arg6[%c0_11, %c0_12], %12 {strides = array<i32>} : memref<128x128xf32, #tpu.memory_space<vmem>>, vector<128x128xf32>,
    } else {
    }
    %c0 = arith.constant 0 : index
    %c0_1 = arith.constant 0 : index
    %3 = vector.load %arg3[%c0, %c0_1] : memref<128x256xf32, #tpu.memory_space<vmem>>, vector<128x256xf32>
    %c0_2 = arith.constant 0 : index
    %c0_3 = arith.constant 0 : index
    %4 = vector.load %arg4[%c0_2, %c0_3] : memref<256x128xf32, #tpu.memory_space<vmem>>, vector<256x128xf32>
    %c0_4 = arith.constant 0 : index
    %c0_5 = arith.constant 0 : index
    %5 = vector.load %arg6[%c0_4, %c0_5] : memref<128x128xf32, #tpu.memory_space<vmem>>, vector<128x128xf32>
    %cst = arith.constant dense<0.000000e+00> : vector<128x128xf32>
    %6 = tpu.matmul %3, %4, %cst {dimension_numbers = #tpu.dot_dimension_numbers<[1], [0], [0], [1], [0, 0, 1, 1], [], []>} : vector<128x256xf32>, vector<256x128xf32>, vector<128x128xf32> -> vector<128x128xf32>
    %7 = arith.addf %5, %6 : vector<128x128xf32>
    %c0_6 = arith.constant 0 : index
    %c0_7 = arith.constant 0 : index
    %8 = vector.load %arg6[%c0_6, %c0_7] : memref<128x128xf32, #tpu.memory_space<vmem>>, vector<128x128xf32>
    tpu.vector_store %arg6[%c0_6, %c0_7], %7 {strides = array<i32>} : memref<128x128xf32, #tpu.memory_space<vmem>>, vector<128x128xf32>,
    %c0_i32_8 = arith.constant 0 : i32
    %9 = arith.cmpi eq, %arg2, %c0_i32_8 : i32
    %10 = arith.extui %9 : i1 to i32
    %c0_i32_9 = arith.constant 0 : i32
    %11 = arith.cmpi ne, %10, %c0_i32_9 : i32
    scf.if %11 {
      %c0_10 = arith.constant 0 : index
      %c0_11 = arith.constant 0 : index
      %12 = vector.load %arg6[%c0_10, %c0_11] : memref<128x128xf32, #tpu.memory_space<vmem>>, vector<128x128xf32>
      %c0_12 = arith.constant 0 : index
      %c0_13 = arith.constant 0 : index
      %13 = vector.load %arg5[%c0_12, %c0_13] : memref<128x128xf32, #tpu.memory_space<vmem>>, vector<128x128xf32>
      tpu.vector_store %arg5[%c0_12, %c0_13], %12 {strides = array<i32>} : memref<128x128xf32, #tpu.memory_space<vmem>>, vector<128x128xf32>,
    } else {
    }
    return
  }
  func.func @transform_0(%arg0: i32, %arg1: i32, %arg2: i32) -> (i32, i32) {
    %c0_i32 = arith.constant 0 : i32
    return %arg0, %arg2 : i32, i32
  }
  func.func @transform_1(%arg0: i32, %arg1: i32, %arg2: i32) -> (i32, i32) {
    %c0_i32 = arith.constant 0 : i32
    return %arg2, %arg1 : i32, i32
  }
  func.func @transform_2(%arg0: i32, %arg1: i32, %arg2: i32) -> (i32, i32) {
    %c0_i32 = arith.constant 0 : i32
    return %arg0, %arg1 : i32, i32
  }
}

</mosaic_0001>

<llo_original>
// kernel: tpu_custom_call.1
$region0: #{tpu_custom_call.1}
  #allocation0 [shape = 'u32[]', space=smem, size = 0x4, offset = 0x4, fixed_abs, tag = 'smem constant byte address 0x4 - core index']
  #allocation1 [shape = 'u32[72,128]{1,0:T(1,128)}', space=vmem, size = 0x9000, scoped, tag = 'internal scratch']
  #allocation2 [shape = 'f32[128,128]{1,0:T(8,128)}', space=vmem, size = 0x10000, scoped, tag = 'scratch operand']
  %s0 = inlined_call_operand.hbm [shape: f32[128,256], index: 0, kind: input, shape index: {}]
  %s1 = inlined_call_operand.hbm [shape: f32[256,128], index: 1, kind: input, shape index: {}]
  %s2 = inlined_call_operand.hbm [shape: f32[128,128], index: 2, kind: output, shape index: {}]
  %s3 = sld [smem:[#allocation0]]
  $region34: #{tpu_custom_call.1} parent=0
    _
  %s5 = ssub.s32 1, %s3
  %s6 = scalar_select 0, %s5, %s3
  $region1: #{tpu_custom_call.1} parent=0
    #allocation3 [shape = 'u8[131072]{0}', space=vmem, size = 0x20000, scoped, tag = 'input window, operand 0, single buffered']
    #allocation4 [shape = 's32[1]{0}', space=sflag, size = 0x4, scoped, tag = 'scoped memory for tpu_custom_call.1']
    #allocation5 [shape = 's32[1]{0}', space=sflag, size = 0x4, scoped, tag = 'scoped memory for tpu_custom_call.1']
    #allocation6 [shape = 'u8[131072]{0}', space=vmem, size = 0x20000, scoped, tag = 'input window, operand 1, single buffered']
    #allocation7 [shape = 's32[1]{0}', space=sflag, size = 0x4, scoped, tag = 'scoped memory for tpu_custom_call.1']
    #allocation8 [shape = 'u8[65536]{0}', space=vmem, size = 0x10000, scoped, tag = 'output window, operand 0, single buffered']
    %7 = vsyncpa [#allocation4], 0
    %8 = vsyncpa [#allocation7], 0
    %9 = vsyncpa [#allocation5], 0
    // Predicated region
    $region2: #{tpu_custom_call.1} parent=1 // pred_check
      _
    $region3: #{tpu_custom_call.1} parent=1 // pred_check_branch
      %11 = sbr.rel (0) target = $region5
    $region4: #{tpu_custom_call.1} parent=1 // pred_region
      %13 = vsyncadd [#allocation4], 0
      %s14 = sshll.u32 %s0, 4
      %s15 = int_to_ptr.hbm [resolvable:$true] %s14
      %s16 = sshll.u32 [#allocation3], 4
      %s17 = int_to_ptr.vmem [resolvable:$true] %s16
      %22 = dma.hbm_to_vmem [thread:$0]  %s15, 4096, %s17, [#allocation4], 256, 256, 16
    $region5: #{tpu_custom_call.1} parent=1 // pred_fallthru
      _
    // Predicated region
    $region6: #{tpu_custom_call.1} parent=1 // pred_check
      _
    $region7: #{tpu_custom_call.1} parent=1 // pred_check_branch
      %24 = sbr.rel (0) target = $region9
    $region8: #{tpu_custom_call.1} parent=1 // pred_region
      %26 = vsyncadd [#allocation7], 0
      %s27 = sshll.u32 %s1, 4
      %s28 = int_to_ptr.hbm [resolvable:$true] %s27
      %s29 = sshll.u32 [#allocation6], 4
      %s30 = int_to_ptr.vmem [resolvable:$true] %s29
      %35 = dma.hbm_to_vmem [thread:$0]  %s28, 4096, %s30, [#allocation7], 128, 128, 8
    $region9: #{tpu_custom_call.1} parent=1 // pred_fallthru
      _
    // Predicated region
    $region10: #{tpu_custom_call.1} parent=1 // pred_check
      _
    $region11: #{tpu_custom_call.1} parent=1 // pred_check_branch
      %37 = sbr.rel (0) target = $region13
    $region12: #{tpu_custom_call.1} parent=1 // pred_region
      %39 = dma.done [#allocation4], 4096
    $region13: #{tpu_custom_call.1} parent=1 // pred_fallthru
      _
    // Predicated region
    $region14: #{tpu_custom_call.1} parent=1 // pred_check
      _
    $region15: #{tpu_custom_call.1} parent=1 // pred_check_branch
      %41 = sbr.rel (0) target = $region17
    $region16: #{tpu_custom_call.1} parent=1 // pred_region
      %43 = dma.done [#allocation7], 4096
    $region17: #{tpu_custom_call.1} parent=1 // pred_fallthru
      _
    %p44 = scmp.eq.s32.totalorder 0, 0
    // Predicated region
    $region18: #{tpu_custom_call.1} parent=1 // pred_check
      %p45 = pneg %p44
    $region19: #{tpu_custom_call.1} parent=1 // pred_check_branch
      %47 = sbr.rel (%p45) target = $region21
    $region20: #{tpu_custom_call.1} parent=1 // pred_region
      %48 = vst [vmem:[#allocation2] sm:$0xff] 0.0
      %49 = vst [vmem:[#allocation2 + $0x8] sm:$0xff] 0.0
      %50 = vst [vmem:[#allocation2 + $0x10] sm:$0xff] 0.0
      %51 = vst [vmem:[#allocation2 + $0x18] sm:$0xff] 0.0
      %52 = vst [vmem:[#allocation2 + $0x20] sm:$0xff] 0.0
      %53 = vst [vmem:[#allocation2 + $0x28] sm:$0xff] 0.0
      %54 = vst [vmem:[#allocation2 + $0x30] sm:$0xff] 0.0
      %55 = vst [vmem:[#allocation2 + $0x38] sm:$0xff] 0.0
      %56 = vst [vmem:[#allocation2 + $0x40] sm:$0xff] 0.0
      %57 = vst [vmem:[#allocation2 + $0x48] sm:$0xff] 0.0
      %58 = vst [vmem:[#allocation2 + $0x50] sm:$0xff] 0.0
      %59 = vst [vmem:[#allocation2 + $0x58] sm:$0xff] 0.0
      %60 = vst [vmem:[#allocation2 + $0x60] sm:$0xff] 0.0
      %61 = vst [vmem:[#allocation2 + $0x68] sm:$0xff] 0.0
      %62 = vst [vmem:[#allocation2 + $0x70] sm:$0xff] 0.0
      %63 = vst [vmem:[#allocation2 + $0x78] sm:$0xff] 0.0
    $region21: #{tpu_custom_call.1} parent=1 // pred_fallthru
      _
    %v64 = vld [vmem:[#allocation3] sm:$0xff]
    %v65 = vld [vmem:[#allocation3 + $0x8] sm:$0xff]
    %v66 = vld [vmem:[#allocation3 + $0x10] sm:$0xff]
    %v67 = vld [vmem:[#allocation3 + $0x18] sm:$0xff]
    %v68 = vld [vmem:[#allocation3 + $0x20] sm:$0xff]
    %v69 = vld [vmem:[#allocation3 + $0x28] sm:$0xff]
    %v70 = vld [vmem:[#allocation3 + $0x30] sm:$0xff]
    %v71 = vld [vmem:[#allocation3 + $0x38] sm:$0xff]
    %v72 = vld [vmem:[#allocation3 + $0x40] sm:$0xff]
    %v73 = vld [vmem:[#allocation3 + $0x48] sm:$0xff]
    %v74 = vld [vmem:[#allocation3 + $0x50] sm:$0xff]
    %v75 = vld [vmem:[#allocation3 + $0x58] sm:$0xff]
    %v76 = vld [vmem:[#allocation3 + $0x60] sm:$0xff]
    %v77 = vld [vmem:[#allocation3 + $0x68] sm:$0xff]
    %v78 = vld [vmem:[#allocation3 + $0x70] sm:$0xff]
    %v79 = vld [vmem:[#allocation3 + $0x78] sm:$0xff]
    %v80 = vld [vmem:[#allocation3 + $0x80] sm:$0xff]
    %v81 = vld [vmem:[#allocation3 + $0x88] sm:$0xff]
    %v82 = vld [vmem:[#allocation3 + $0x90] sm:$0xff]
    %v83 = vld [vmem:[#allocation3 + $0x98] sm:$0xff]
    %v84 = vld [vmem:[#allocation3 + $0xa0] sm:$0xff]
    %v85 = vld [vmem:[#allocation3 + $0xa8] sm:$0xff]
    %v86 = vld [vmem:[#allocation3 + $0xb0] sm:$0xff]
    %v87 = vld [vmem:[#allocation3 + $0xb8] sm:$0xff]
    %v88 = vld [vmem:[#allocation3 + $0xc0] sm:$0xff]
    %v89 = vld [vmem:[#allocation3 + $0xc8] sm:$0xff]
    %v90 = vld [vmem:[#allocation3 + $0xd0] sm:$0xff]
    %v91 = vld [vmem:[#allocation3 + $0xd8] sm:$0xff]
    %v92 = vld [vmem:[#allocation3 + $0xe0] sm:$0xff]
    %v93 = vld [vmem:[#allocation3 + $0xe8] sm:$0xff]
    %v94 = vld [vmem:[#allocation3 + $0xf0] sm:$0xff]
    %v95 = vld [vmem:[#allocation3 + $0xf8] sm:$0xff]
    %v96 = vld [vmem:[#allocation6] sm:$0xff]
    %v97 = vld [vmem:[#allocation6 + $0x8] sm:$0xff]
    %v98 = vld [vmem:[#allocation6 + $0x10] sm:$0xff]
    %v99 = vld [vmem:[#allocation6 + $0x18] sm:$0xff]
    %v100 = vld [vmem:[#allocation6 + $0x20] sm:$0xff]
    %v101 = vld [vmem:[#allocation6 + $0x28] sm:$0xff]
    %v102 = vld [vmem:[#allocation6 + $0x30] sm:$0xff]
    %v103 = vld [vmem:[#allocation6 + $0x38] sm:$0xff]
    %v104 = vld [vmem:[#allocation6 + $0x40] sm:$0xff]
    %v105 = vld [vmem:[#allocation6 + $0x48] sm:$0xff]
    %v106 = vld [vmem:[#allocation6 + $0x50] sm:$0xff]
    %v107 = vld [vmem:[#allocation6 + $0x58] sm:$0xff]
    %v108 = vld [vmem:[#allocation6 + $0x60] sm:$0xff]
    %v109 = vld [vmem:[#allocation6 + $0x68] sm:$0xff]
    %v110 = vld [vmem:[#allocation6 + $0x70] sm:$0xff]
    %v111 = vld [vmem:[#allocation6 + $0x78] sm:$0xff]
    %v112 = vld [vmem:[#allocation6 + $0x80] sm:$0xff]
    %v113 = vld [vmem:[#allocation6 + $0x88] sm:$0xff]
    %v114 = vld [vmem:[#allocation6 + $0x90] sm:$0xff]
    %v115 = vld [vmem:[#allocation6 + $0x98] sm:$0xff]
    %v116 = vld [vmem:[#allocation6 + $0xa0] sm:$0xff]
    %v117 = vld [vmem:[#allocation6 + $0xa8] sm:$0xff]
    %v118 = vld [vmem:[#allocation6 + $0xb0] sm:$0xff]
    %v119 = vld [vmem:[#allocation6 + $0xb8] sm:$0xff]
    %v120 = vld [vmem:[#allocation6 + $0xc0] sm:$0xff]
    %v121 = vld [vmem:[#allocation6 + $0xc8] sm:$0xff]
    %v122 = vld [vmem:[#allocation6 + $0xd0] sm:$0xff]
    %v123 = vld [vmem:[#allocation6 + $0xd8] sm:$0xff]
    %v124 = vld [vmem:[#allocation6 + $0xe0] sm:$0xff]
    %v125 = vld [vmem:[#allocation6 + $0xe8] sm:$0xff]
    %v126 = vld [vmem:[#allocation6 + $0xf0] sm:$0xff]
    %v127 = vld [vmem:[#allocation6 + $0xf8] sm:$0xff]
    %v128 = vld [vmem:[#allocation2] sm:$0xff]
    %v129 = vld [vmem:[#allocation2 + $0x8] sm:$0xff]
    %v130 = vld [vmem:[#allocation2 + $0x10] sm:$0xff]
    %v131 = vld [vmem:[#allocation2 + $0x18] sm:$0xff]
    %v132 = vld [vmem:[#allocation2 + $0x20] sm:$0xff]
    %v133 = vld [vmem:[#allocation2 + $0x28] sm:$0xff]
    %v134 = vld [vmem:[#allocation2 + $0x30] sm:$0xff]
    %v135 = vld [vmem:[#allocation2 + $0x38] sm:$0xff]
    %v136 = vld [vmem:[#allocation2 + $0x40] sm:$0xff]
    %v137 = vld [vmem:[#allocation2 + $0x48] sm:$0xff]
    %v138 = vld [vmem:[#allocation2 + $0x50] sm:$0xff]
    %v139 = vld [vmem:[#allocation2 + $0x58] sm:$0xff]
    %v140 = vld [vmem:[#allocation2 + $0x60] sm:$0xff]
    %v141 = vld [vmem:[#allocation2 + $0x68] sm:$0xff]
    %v142 = vld [vmem:[#allocation2 + $0x70] sm:$0xff]
    %v143 = vld [vmem:[#allocation2 + $0x78] sm:$0xff]
    %144 = vmatpush.msra.mxu0 %v111
    %145 = vmatpush.msra.mxu0 %v110
    %146 = vmatpush.msra.mxu0 %v109
    %147 = vmatpush.msra.mxu0 %v108
    %148 = vmatpush.msra.mxu0 %v107
    %149 = vmatpush.msra.mxu0 %v106
    %150 = vmatpush.msra.mxu0 %v105
    %151 = vmatpush.msra.mxu0 %v104
    %152 = vmatpush.msra.mxu0 %v103
    %153 = vmatpush.msra.mxu0 %v102
    %154 = vmatpush.msra.mxu0 %v101
    %155 = vmatpush.msra.mxu0 %v100
    %156 = vmatpush.msra.mxu0 %v99
    %157 = vmatpush.msra.mxu0 %v98
    %158 = vmatpush.msra.mxu0 %v97
    %159 = vmatpush.msra.mxu0 %v96
    %160 = vmatmul.f32.gmra.mxu0 %v64
    %v161 = vpop.f32.mrf.mxu0
    %v162 = vadd.f32 0.0, %v161
    %163 = vmatmul.f32.gmra.mxu0 %v66
    %v164 = vpop.f32.mrf.mxu0
    %v165 = vadd.f32 0.0, %v164
    %166 = vmatmul.f32.gmra.mxu0 %v68
    %v167 = vpop.f32.mrf.mxu0
    %v168 = vadd.f32 0.0, %v167
    %169 = vmatmul.f32.gmra.mxu0 %v70
    %v170 = vpop.f32.mrf.mxu0
    %v171 = vadd.f32 0.0, %v170
    %172 = vmatmul.f32.gmra.mxu0 %v72
    %v173 = vpop.f32.mrf.mxu0
    %v174 = vadd.f32 0.0, %v173
    %175 = vmatmul.f32.gmra.mxu0 %v74
    %v176 = vpop.f32.mrf.mxu0
    %v177 = vadd.f32 0.0, %v176
    %178 = vmatmul.f32.gmra.mxu0 %v76
    %v179 = vpop.f32.mrf.mxu0
    %v180 = vadd.f32 0.0, %v179
    %181 = vmatmul.f32.gmra.mxu0 %v78
    %v182 = vpop.f32.mrf.mxu0
    %v183 = vadd.f32 0.0, %v182
    %184 = vmatmul.f32.gmra.mxu0 %v80
    %v185 = vpop.f32.mrf.mxu0
    %v186 = vadd.f32 0.0, %v185
    %187 = vmatmul.f32.gmra.mxu0 %v82
    %v188 = vpop.f32.mrf.mxu0
    %v189 = vadd.f32 0.0, %v188
    %190 = vmatmul.f32.gmra.mxu0 %v84
    %v191 = vpop.f32.mrf.mxu0
    %v192 = vadd.f32 0.0, %v191
    %193 = vmatmul.f32.gmra.mxu0 %v86
    %v194 = vpop.f32.mrf.mxu0
    %v195 = vadd.f32 0.0, %v194
    %196 = vmatmul.f32.gmra.mxu0 %v88
    %v197 = vpop.f32.mrf.mxu0
    %v198 = vadd.f32 0.0, %v197
    %199 = vmatmul.f32.gmra.mxu0 %v90
    %v200 = vpop.f32.mrf.mxu0
    %v201 = vadd.f32 0.0, %v200
    %202 = vmatmul.f32.gmra.mxu0 %v92
    %v203 = vpop.f32.mrf.mxu0
    %v204 = vadd.f32 0.0, %v203
    %205 = vmatmul.f32.gmra.mxu0 %v94
    %v206 = vpop.f32.mrf.mxu0
    %v207 = vadd.f32 0.0, %v206
    %208 = vdwg.mxu0
    %209 = vmatpush.msra.mxu0 %v127
    %210 = vmatpush.msra.mxu0 %v126
    %211 = vmatpush.msra.mxu0 %v125
    %212 = vmatpush.msra.mxu0 %v124
    %213 = vmatpush.msra.mxu0 %v123
    %214 = vmatpush.msra.mxu0 %v122
    %215 = vmatpush.msra.mxu0 %v121
    %216 = vmatpush.msra.mxu0 %v120
    %217 = vmatpush.msra.mxu0 %v119
    %218 = vmatpush.msra.mxu0 %v118
    %219 = vmatpush.msra.mxu0 %v117
    %220 = vmatpush.msra.mxu0 %v116
    %221 = vmatpush.msra.mxu0 %v115
    %222 = vmatpush.msra.mxu0 %v114
    %223 = vmatpush.msra.mxu0 %v113
    %224 = vmatpush.msra.mxu0 %v112
    %225 = vmatmul.f32.gmra.mxu0 %v65
    %v226 = vpop.f32.mrf.mxu0
    %v227 = vadd.f32 %v162, %v226
    %228 = vmatmul.f32.gmra.mxu0 %v67
    %v229 = vpop.f32.mrf.mxu0
    %v230 = vadd.f32 %v165, %v229
    %231 = vmatmul.f32.gmra.mxu0 %v69
    %v232 = vpop.f32.mrf.mxu0
    %v233 = vadd.f32 %v168, %v232
    %234 = vmatmul.f32.gmra.mxu0 %v71
    %v235 = vpop.f32.mrf.mxu0
    %v236 = vadd.f32 %v171, %v235
    %237 = vmatmul.f32.gmra.mxu0 %v73
    %v238 = vpop.f32.mrf.mxu0
    %v239 = vadd.f32 %v174, %v238
    %240 = vmatmul.f32.gmra.mxu0 %v75
    %v241 = vpop.f32.mrf.mxu0
    %v242 = vadd.f32 %v177, %v241
    %243 = vmatmul.f32.gmra.mxu0 %v77
    %v244 = vpop.f32.mrf.mxu0
    %v245 = vadd.f32 %v180, %v244
    %246 = vmatmul.f32.gmra.mxu0 %v79
    %v247 = vpop.f32.mrf.mxu0
    %v248 = vadd.f32 %v183, %v247
    %249 = vmatmul.f32.gmra.mxu0 %v81
    %v250 = vpop.f32.mrf.mxu0
    %v251 = vadd.f32 %v186, %v250
    %252 = vmatmul.f32.gmra.mxu0 %v83
    %v253 = vpop.f32.mrf.mxu0
    %v254 = vadd.f32 %v189, %v253
    %255 = vmatmul.f32.gmra.mxu0 %v85
    %v256 = vpop.f32.mrf.mxu0
    %v257 = vadd.f32 %v192, %v256
    %258 = vmatmul.f32.gmra.mxu0 %v87
    %v259 = vpop.f32.mrf.mxu0
    %v260 = vadd.f32 %v195, %v259
    %261 = vmatmul.f32.gmra.mxu0 %v89
    %v262 = vpop.f32.mrf.mxu0
    %v263 = vadd.f32 %v198, %v262
    %264 = vmatmul.f32.gmra.mxu0 %v91
    %v265 = vpop.f32.mrf.mxu0
    %v266 = vadd.f32 %v201, %v265
    %267 = vmatmul.f32.gmra.mxu0 %v93
    %v268 = vpop.f32.mrf.mxu0
    %v269 = vadd.f32 %v204, %v268
    %270 = vmatmul.f32.gmra.mxu0 %v95
    %v271 = vpop.f32.mrf.mxu0
    %v272 = vadd.f32 %v207, %v271
    %273 = vdwg.mxu0
    %v274 = vadd.f32 %v128, %v227
    %v275 = vadd.f32 %v129, %v230
    %v276 = vadd.f32 %v130, %v233
    %v277 = vadd.f32 %v131, %v236
    %v278 = vadd.f32 %v132, %v239
    %v279 = vadd.f32 %v133, %v242
    %v280 = vadd.f32 %v134, %v245
    %v281 = vadd.f32 %v135, %v248
    %v282 = vadd.f32 %v136, %v251
    %v283 = vadd.f32 %v137, %v254
    %v284 = vadd.f32 %v138, %v257
    %v285 = vadd.f32 %v139, %v260
    %v286 = vadd.f32 %v140, %v263
    %v287 = vadd.f32 %v141, %v266
    %v288 = vadd.f32 %v142, %v269
    %v289 = vadd.f32 %v143, %v272
    %290 = vst [vmem:[#allocation2] sm:$0xff] %v274
    %291 = vst [vmem:[#allocation2 + $0x8] sm:$0xff] %v275
    %292 = vst [vmem:[#allocation2 + $0x10] sm:$0xff] %v276
    %293 = vst [vmem:[#allocation2 + $0x18] sm:$0xff] %v277
    %294 = vst [vmem:[#allocation2 + $0x20] sm:$0xff] %v278
    %295 = vst [vmem:[#allocation2 + $0x28] sm:$0xff] %v279
    %296 = vst [vmem:[#allocation2 + $0x30] sm:$0xff] %v280
    %297 = vst [vmem:[#allocation2 + $0x38] sm:$0xff] %v281
    %298 = vst [vmem:[#allocation2 + $0x40] sm:$0xff] %v282
    %299 = vst [vmem:[#allocation2 + $0x48] sm:$0xff] %v283
    %300 = vst [vmem:[#allocation2 + $0x50] sm:$0xff] %v284
    %301 = vst [vmem:[#allocation2 + $0x58] sm:$0xff] %v285
    %302 = vst [vmem:[#allocation2 + $0x60] sm:$0xff] %v286
    %303 = vst [vmem:[#allocation2 + $0x68] sm:$0xff] %v287
    %304 = vst [vmem:[#allocation2 + $0x70] sm:$0xff] %v288
    %305 = vst [vmem:[#allocation2 + $0x78] sm:$0xff] %v289
    // Predicated region
    $region22: #{tpu_custom_call.1} parent=1 // pred_check
      %p306 = pneg %p44
    $region23: #{tpu_custom_call.1} parent=1 // pred_check_branch
      %308 = sbr.rel (%p306) target = $region25
    $region24: #{tpu_custom_call.1} parent=1 // pred_region
      %v309 = vld [vmem:[#allocation2] sm:$0xff]
      %v310 = vld [vmem:[#allocation2 + $0x8] sm:$0xff]
      %v311 = vld [vmem:[#allocation2 + $0x10] sm:$0xff]
      %v312 = vld [vmem:[#allocation2 + $0x18] sm:$0xff]
      %v313 = vld [vmem:[#allocation2 + $0x20] sm:$0xff]
      %v314 = vld [vmem:[#allocation2 + $0x28] sm:$0xff]
      %v315 = vld [vmem:[#allocation2 + $0x30] sm:$0xff]
      %v316 = vld [vmem:[#allocation2 + $0x38] sm:$0xff]
      %v317 = vld [vmem:[#allocation2 + $0x40] sm:$0xff]
      %v318 = vld [vmem:[#allocation2 + $0x48] sm:$0xff]
      %v319 = vld [vmem:[#allocation2 + $0x50] sm:$0xff]
      %v320 = vld [vmem:[#allocation2 + $0x58] sm:$0xff]
      %v321 = vld [vmem:[#allocation2 + $0x60] sm:$0xff]
      %v322 = vld [vmem:[#allocation2 + $0x68] sm:$0xff]
      %v323 = vld [vmem:[#allocation2 + $0x70] sm:$0xff]
      %v324 = vld [vmem:[#allocation2 + $0x78] sm:$0xff]
      %325 = vst [vmem:[#allocation8] sm:$0xff] %v309
      %326 = vst [vmem:[#allocation8 + $0x8] sm:$0xff] %v310
      %327 = vst [vmem:[#allocation8 + $0x10] sm:$0xff] %v311
      %328 = vst [vmem:[#allocation8 + $0x18] sm:$0xff] %v312
      %329 = vst [vmem:[#allocation8 + $0x20] sm:$0xff] %v313
      %330 = vst [vmem:[#allocation8 + $0x28] sm:$0xff] %v314
      %331 = vst [vmem:[#allocation8 + $0x30] sm:$0xff] %v315
      %332 = vst [vmem:[#allocation8 + $0x38] sm:$0xff] %v316
      %333 = vst [vmem:[#allocation8 + $0x40] sm:$0xff] %v317
      %334 = vst [vmem:[#allocation8 + $0x48] sm:$0xff] %v318
      %335 = vst [vmem:[#allocation8 + $0x50] sm:$0xff] %v319
      %336 = vst [vmem:[#allocation8 + $0x58] sm:$0xff] %v320
      %337 = vst [vmem:[#allocation8 + $0x60] sm:$0xff] %v321
      %338 = vst [vmem:[#allocation8 + $0x68] sm:$0xff] %v322
      %339 = vst [vmem:[#allocation8 + $0x70] sm:$0xff] %v323
      %340 = vst [vmem:[#allocation8 + $0x78] sm:$0xff] %v324
    $region25: #{tpu_custom_call.1} parent=1 // pred_fallthru
      _
    // Predicated region
    $region26: #{tpu_custom_call.1} parent=1 // pred_check
      _
    $region27: #{tpu_custom_call.1} parent=1 // pred_check_branch
      %342 = sbr.rel (0) target = $region29
    $region28: #{tpu_custom_call.1} parent=1 // pred_region
      %344 = vsyncadd [#allocation5], 0
      %s345 = sshll.u32 [#allocation8], 4
      %s346 = int_to_ptr.vmem [resolvable:$true] %s345
      %s347 = sshll.u32 %s2, 4
      %s348 = int_to_ptr.hbm [resolvable:$true] %s347
      %353 = dma.vmem_to_hbm [thread:$0]  %s346, 2048, %s348, [#allocation5], 128, 128, 8
    $region29: #{tpu_custom_call.1} parent=1 // pred_fallthru
      _
    // Predicated region
    $region30: #{tpu_custom_call.1} parent=1 // pred_check
      _
    $region31: #{tpu_custom_call.1} parent=1 // pred_check_branch
      %355 = sbr.rel (0) target = $region33
    $region32: #{tpu_custom_call.1} parent=1 // pred_region
      %357 = dma.done [#allocation5], 2048
    $region33: #{tpu_custom_call.1} parent=1 // pred_fallthru
      _
    %358 = vsyncpa [#allocation4], 1
    %359 = vsyncpa [#allocation7], 1
    %360 = vsyncpa [#allocation5], 1

</llo_original>
